<compile_context>
chip_gen: v7x
topology: tpu7x:2x2x1
jax: 0.10.0
libtpu: 0.0.40
codegen_flags: <defaults>
</compile_context>

<pallas_src>
import functools

import jax
import jax.numpy as jnp
from jax.experimental import pallas as pl
from jax.experimental.pallas import tpu as pltpu


def _round_up(x, m):
    return ((x + m - 1) // m) * m


# ----------------------------------------------------------------------------
# Fused Pallas kernel:
#   out = relu?( (A @ B) * [row_ratio] * bn_scale + bn_shift + [residual] )
# with optional K-reduction grid axis (f32 VMEM accumulator only when nk > 1).
# ----------------------------------------------------------------------------
def _fused_matmul_bn_kernel(*refs, apply_relu, has_ratio, has_residual, nk):
    it = iter(refs)
    a_ref = next(it)                                   # (tm, tk)  bf16
    b_ref = next(it)                                   # (tk, C)   bf16
    rs_ref = next(it) if has_ratio else None           # (tm, 1)   f32
    sc_ref = next(it)                                  # (1, C)    f32
    sh_ref = next(it)                                  # (1, C)    f32
    res_ref = next(it) if has_residual else None       # (tm, C)   bf16
    o_ref = next(it)                                   # (tm, C)
    acc_ref = next(it) if nk > 1 else None             # (tm, C)   f32 scratch

    def epilogue(acc):
        if has_ratio:
            acc = acc * rs_ref[...]                    # partial-conv ratio
        acc = acc * sc_ref[...] + sh_ref[...]          # folded BatchNorm
        if has_residual:
            acc = acc + res_ref[...].astype(jnp.float32)
        if apply_relu:
            acc = jnp.maximum(acc, 0.0)
        o_ref[...] = acc.astype(o_ref.dtype)

    if nk == 1:
        epilogue(jnp.dot(a_ref[...], b_ref[...],
                         preferred_element_type=jnp.float32))
    else:
        k = pl.program_id(1)

        @pl.when(k == 0)
        def _():
            acc_ref[...] = jnp.zeros_like(acc_ref)

        acc_ref[...] += jnp.dot(a_ref[...], b_ref[...],
                                preferred_element_type=jnp.float32)

        @pl.when(k == nk - 1)
        def _():
            epilogue(acc_ref[...])


def fused_matmul_bn(a, b, row_scale, bn_scale, bn_shift, residual, *,
                    apply_relu, out_dtype):
    M, K = a.shape
    Kb, C = b.shape
    assert K == Kb
    has_ratio = row_scale is not None
    has_residual = residual is not None

    # bf16 MXU path (accumulation stays f32 inside the kernel)
    a = a.astype(jnp.bfloat16)
    b = b.astype(jnp.bfloat16)
    if has_residual:
        residual = residual.astype(jnp.bfloat16)       # halve residual stream
    if has_ratio:
        row_scale = row_scale.astype(jnp.float32)
    bn_scale = bn_scale.astype(jnp.float32)
    bn_shift = bn_shift.astype(jnp.float32)

    # ---- K: keep whole whenever it fits (always for ResNet-50) ---------------
    K_MAX_SINGLE = 4608
    if K <= K_MAX_SINGLE:
        tk = K
    else:
        tk = 0
        for cand in range(K_MAX_SINGLE, 127, -128):    # 128-aligned divisor
            if K % cand == 0:
                tk = cand
                break
        if tk == 0:                                    # last resort: pad K
            tk = 2048
            Kp = _round_up(K, tk)
            a = jnp.pad(a, ((0, 0), (0, Kp - K)))
            b = jnp.pad(b, ((0, Kp - K), (0, 0)))
            K = Kp
    nk = K // tk

    # ---- M tiling: no padding, cdiv grid; size tm from a VMEM estimate -------
    out_itemsize = jnp.dtype(out_dtype).itemsize

    def vmem_estimate(tm):
        est = 2 * tm * tk * 2                          # A, double-buffered bf16
        est += 2 * tk * C * 2                          # B, double-buffered bf16
        est += 2 * tm * C * out_itemsize               # out, double-buffered
        if has_residual:
            est += 2 * tm * C * 2                      # residual bf16
        if has_ratio:
            est += 2 * tm * 4
        est += 2 * 2 * C * 4                           # bn scale/shift
        if nk > 1:
            est += tm * C * 4                          # f32 accumulator
        return est

    budget = 48 * 1024 * 1024                          # safe on v7x's 64 MiB
    tm = 8
    for cand in (512, 256, 128, 64, 32, 16, 8):
        if vmem_estimate(cand) <= budget:
            tm = cand
            break
    # keep >= 2 M tiles so the "parallel" axis can shard across 2 TCs (v7x)
    while tm > 8 and pl.cdiv(M, tm) < 2:
        tm //= 2

    grid = (pl.cdiv(M, tm), nk)

    in_specs = [
        pl.BlockSpec((tm, tk), lambda i, k: (i, k)),   # A tile
        pl.BlockSpec((tk, C), lambda i, k: (k, 0)),    # weight (resident, nk=1)
    ]
    inputs = [a, b]
    if has_ratio:
        in_specs.append(pl.BlockSpec((tm, 1), lambda i, k: (i, 0)))
        inputs.append(row_scale)
    in_specs.append(pl.BlockSpec((1, C), lambda i, k: (0, 0)))
    inputs.append(bn_scale)
    in_specs.append(pl.BlockSpec((1, C), lambda i, k: (0, 0)))
    inputs.append(bn_shift)
    if has_residual:
        in_specs.append(pl.BlockSpec((tm, C), lambda i, k: (i, 0)))
        inputs.append(residual)

    kern = functools.partial(_fused_matmul_bn_kernel, apply_relu=apply_relu,
                             has_ratio=has_ratio, has_residual=has_residual,
                             nk=nk)

    scratch_shapes = [pltpu.VMEM((tm, C), jnp.float32)] if nk > 1 else []

    est = vmem_estimate(tm)
    vmem_limit = int(min(64 * 1024 * 1024,
                         max(32 * 1024 * 1024, est + 4 * 1024 * 1024)))

    bytes_accessed = (M * K * 2 + K * C * 2 + M * C * out_itemsize
                      + (M * C * 2 if has_residual else 0)
                      + (M * 4 if has_ratio else 0) + 2 * C * 4)
    cost = pl.CostEstimate(flops=2 * M * K * C, transcendentals=0,
                           bytes_accessed=int(bytes_accessed))

    return pl.pallas_call(
        kern,
        out_shape=jax.ShapeDtypeStruct((M, C), out_dtype),
        grid_spec=pltpu.PrefetchScalarGridSpec(
            num_scalar_prefetch=0,
            grid=grid,
            in_specs=in_specs,
            out_specs=pl.BlockSpec((tm, C), lambda i, k: (i, 0)),
            scratch_shapes=scratch_shapes,
        ),
        compiler_params=pltpu.CompilerParams(
            dimension_semantics=("parallel", "arbitrary"),
            vmem_limit_bytes=vmem_limit),
        cost_estimate=cost,
    )(*inputs)


# ----------------------------------------------------------------------------
# Glue: im2col for the 3x3 conv (ky, kx outer; channels inner)
# TODO(synk): im2col is still materialized in HBM (bf16); tap-streaming with a
#             halo DMA would remove the 9x conv2 input traffic.
# ----------------------------------------------------------------------------
def _im2col_3x3(x, stride):
    N, H, W, C = x.shape
    xp = jnp.pad(x, ((0, 0), (1, 1), (1, 1), (0, 0)))
    Ho = (H + 2 - 3) // stride + 1
    Wo = (W + 2 - 3) // stride + 1
    cols = []
    for ky in range(3):
        for kx in range(3):
            patch = xp[:,
                       ky:ky + (Ho - 1) * stride + 1:stride,
                       kx:kx + (Wo - 1) * stride + 1:stride, :]
            cols.append(patch)
    return jnp.concatenate(cols, axis=-1), Ho, Wo     # (N, Ho, Wo, 9*C)


def _partial_conv_ratio_3x3(H, W, stride):
    """slide_winsize / (#ones under a padded 3x3 window), shape-only."""
    Ho = (H + 2 - 3) // stride + 1
    Wo = (W + 2 - 3) // stride + 1
    oi = jnp.arange(Ho) * stride
    oj = jnp.arange(Wo) * stride
    ri = jnp.minimum(oi + 1, H - 1) - jnp.maximum(oi - 1, 0) + 1
    cj = jnp.minimum(oj + 1, W - 1) - jnp.maximum(oj - 1, 0) + 1
    counts = (ri[:, None] * cj[None, :]).astype(jnp.float32)
    return 9.0 / (counts + 1e-8), Ho, Wo               # (Ho, Wo)


# ----------------------------------------------------------------------------
# Lane-dense padding of the intermediate channel count (planes -> mult. of 128)
# Zero-padded weight rows/cols make padded channels inert; BN scale/shift of
# padded output channels are zero, so o1/o2 stay exactly zero there.
# ----------------------------------------------------------------------------
def _pad_planes_lane_dense(p, planes, lane=128):
    Cp = _round_up(planes, lane)
    if Cp == planes:
        return p, planes
    pc = Cp - planes
    w2_hwio = jnp.pad(p["w2_hwio"], ((0, 0), (0, 0), (0, pc), (0, pc)))
    pp = dict(
        w1=jnp.pad(p["w1"], ((0, 0), (0, pc))),            # (Cin, Cp)
        w2_mat=w2_hwio.reshape(9 * Cp, Cp),                 # (9*Cp, Cp)
        w3=jnp.pad(p["w3"], ((0, pc), (0, 0))),             # (Cp, Cout)
        s1=jnp.pad(p["s1"], ((0, 0), (0, pc))),
        b1=jnp.pad(p["b1"], ((0, 0), (0, pc))),
        s2=jnp.pad(p["s2"], ((0, 0), (0, pc))),
        b2=jnp.pad(p["b2"], ((0, 0), (0, pc))),
        s3=p["s3"], b3=p["b3"],
    )
    return pp, Cp


# ----------------------------------------------------------------------------
# Block forward (wrapper around three fused kernel calls)
# ----------------------------------------------------------------------------
def block_forward(x_nhwc, p, stride=1, out_dtype=jnp.float32):
    # out_dtype=jnp.bfloat16 when this block feeds another bf16 block.
    N, H, W, Cin = x_nhwc.shape
    planes = p["w1"].shape[1]
    Cout = p["w3"].shape[1]
    M = N * H * W

    pp, Cp = _pad_planes_lane_dense(p, planes)

    # conv1: 1x1 PartialConv (ratio==1) + BN + ReLU   -> bf16, lane-dense Cp
    a1 = x_nhwc.reshape(M, Cin)
    o1 = fused_matmul_bn(a1, pp["w1"], None, pp["s1"], pp["b1"], None,
                         apply_relu=True, out_dtype=jnp.bfloat16)
    o1 = o1.reshape(N, H, W, Cp)

    # conv2: 3x3 PartialConv (padded -> border rescale) + BN + ReLU
    patches, Ho, Wo = _im2col_3x3(o1, stride)          # bf16
    Mo = N * Ho * Wo
    ratio, _, _ = _partial_conv_ratio_3x3(H, W, stride)
    ratio_rows = jnp.broadcast_to(ratio[None, :, :, None],
                                  (N, Ho, Wo, 1)).reshape(Mo, 1)
    a2 = patches.reshape(Mo, 9 * Cp)
    o2 = fused_matmul_bn(a2, pp["w2_mat"], ratio_rows, pp["s2"], pp["b2"], None,
                         apply_relu=True, out_dtype=jnp.bfloat16)

    # conv3: 1x1 PartialConv + BN, residual add + final ReLU (fused)
    assert stride == 1 and Cout == Cin, "identity residual only"
    a3 = o2.reshape(Mo, Cp)
    residual = x_nhwc.reshape(M, Cin)                  # bf16 cast in wrapper
    out = fused_matmul_bn(a3, pp["w3"], None, pp["s3"], pp["b3"], residual,
                          apply_relu=True, out_dtype=out_dtype)
    return out.reshape(N, Ho, Wo, Cout)


# ----------------------------------------------------------------------------
# Pure-JAX f32 reference (for correctness check)
# ----------------------------------------------------------------------------
def _ref_forward(x, p, stride=1):
    def bn(y, s, b):
        return y * s + b

    y = jnp.einsum("nhwc,cd->nhwd", x, p["w1"])
    y = jnp.maximum(bn(y, p["s1"], p["b1"]), 0.0)

    z = jax.lax.conv_general_dilated(
        y, p["w2_hwio"], (stride, stride), ((1, 1), (1, 1)),
        dimension_numbers=("NHWC", "HWIO", "NHWC"))
    ones = jnp.ones((1, y.shape[1], y.shape[2], 1), jnp.float32)
    cnt = jax.lax.conv_general_dilated(
        ones, jnp.ones((3, 3, 1, 1), jnp.float32), (stride, stride),
        ((1, 1), (1, 1)), dimension_numbers=("NHWC", "HWIO", "NHWC"))
    z = z * (9.0 / (cnt + 1e-8))
    z = jnp.maximum(bn(z, p["s2"], p["b2"]), 0.0)

    w = jnp.einsum("nhwc,cd->nhwd", z, p["w3"])
    w = bn(w, p["s3"], p["b3"])
    return jnp.maximum(w + x, 0.0)


# ----------------------------------------------------------------------------
# Deterministic parameter construction
# ----------------------------------------------------------------------------
def make_params(key, inplanes, planes, expansion=4):
    ks = list(jax.random.split(key, 12))
    outp = planes * expansion

    def bn_fold(kg, kb, km, kv, c, eps=1e-5):
        gamma = 0.5 + jax.random.uniform(kg, (c,))
        beta = 0.1 * jax.random.normal(kb, (c,))
        mean = 0.1 * jax.random.normal(km, (c,))
        var = 0.5 + jax.random.uniform(kv, (c,))
        scale = gamma / jnp.sqrt(var + eps)
        shift = beta - mean * scale
        return scale.reshape(1, c), shift.reshape(1, c)

    # conv weights in PyTorch layout (Cout, Cin, kh, kw), then converted
    w1_t = 0.1 * jax.random.normal(ks[0], (planes, inplanes, 1, 1))
    w2_t = 0.1 * jax.random.normal(ks[1], (planes, planes, 3, 3))
    w3_t = 0.1 * jax.random.normal(ks[2], (outp, planes, 1, 1))

    w1 = jnp.transpose(w1_t[:, :, 0, 0], (1, 0))                  # (Cin, planes)
    w2_hwio = jnp.transpose(w2_t, (2, 3, 1, 0))                   # (3,3,Cin,Cout)
    w2_mat = w2_hwio.reshape(9 * planes, planes)                  # im2col order
    w3 = jnp.transpose(w3_t[:, :, 0, 0], (1, 0))                  # (planes, Cout)

    s1, b1 = bn_fold(ks[3], ks[4], ks[5], ks[6], planes)
    s2, b2 = bn_fold(ks[7], ks[8], ks[9], ks[10], planes)
    s3, b3 = bn_fold(*jax.random.split(ks[11], 4), outp)

    return dict(w1=w1.astype(jnp.float32), w2_mat=w2_mat.astype(jnp.float32),
                w2_hwio=w2_hwio.astype(jnp.float32), w3=w3.astype(jnp.float32),
                s1=s1, b1=b1, s2=s2, b2=b2, s3=s3, b3=b3)


if __name__ == "__main__":
    inplanes, planes = 16, 4      # inplanes == planes * expansion (identity residual)
    N, H, W = 2, 8, 8
    key = jax.random.PRNGKey(0)
    kx, kp = jax.random.split(key)

    x_nchw = jax.random.normal(kx, (N, inplanes, H, W), jnp.float32)
    x_nhwc = jnp.transpose(x_nchw, (0, 2, 3, 1))
    params = make_params(kp, inplanes, planes)

    out = jax.block_until_ready(block_forward(x_nhwc, params, stride=1))
    ref = jax.block_until_ready(_ref_forward(x_nhwc, params, stride=1))

    assert out.shape == (N, H, W, planes * 4)
    # bf16 MXU path + bf16 intermediates/residual vs f32 reference
    assert jnp.allclose(out, ref, rtol=5e-2, atol=5e-2), (
        float(jnp.max(jnp.abs(out - ref))))
    print("KERNEL_OK")
</pallas_src>

<mosaic_0001>
module attributes {stable_mosaic.version = 11 : i64} {
  func.func @_fused_matmul_bn_kernel(%arg0: i32, %arg1: i32, %arg2: memref<64x16xbf16, #tpu.memory_space<vmem>>, %arg3: memref<16x128xbf16, #tpu.memory_space<vmem>>, %arg4: memref<1x128xf32, #tpu.memory_space<vmem>>, %arg5: memref<1x128xf32, #tpu.memory_space<vmem>>, %arg6: memref<64x128xbf16, #tpu.memory_space<vmem>>) attributes {dimension_semantics = [#tpu.dimension_semantics<parallel>, #tpu.dimension_semantics<arbitrary>], iteration_bounds = array<i64: 2, 1>, scalar_prefetch = 0 : i64, scratch_operands = 0 : i64, tpu.core_type = #tpu.core_type<tc>, window_params = [{transform_indices = @transform_0, window_bounds = array<i64: 64, 16>}, {transform_indices = @transform_1, window_bounds = array<i64: 16, 128>}, {pipeline_mode = #tpu.pipeline_mode<synchronous>, transform_indices = @transform_2, window_bounds = array<i64: 1, 128>}, {pipeline_mode = #tpu.pipeline_mode<synchronous>, transform_indices = @transform_3, window_bounds = array<i64: 1, 128>}, {transform_indices = @transform_4, window_bounds = array<i64: 64, 128>}]} {
    %c0 = arith.constant 0 : index
    %c0_0 = arith.constant 0 : index
    %0 = vector.load %arg2[%c0, %c0_0] : memref<64x16xbf16, #tpu.memory_space<vmem>>, vector<64x16xbf16>
    %c0_1 = arith.constant 0 : index
    %c0_2 = arith.constant 0 : index
    %1 = vector.load %arg3[%c0_1, %c0_2] : memref<16x128xbf16, #tpu.memory_space<vmem>>, vector<16x128xbf16>
    %cst = arith.constant dense<0.000000e+00> : vector<64x128xf32>
    %2 = tpu.matmul %0, %1, %cst {dimension_numbers = #tpu.dot_dimension_numbers<[1], [0], [0], [1], [0, 0, 1, 1], [], []>} : vector<64x16xbf16>, vector<16x128xbf16>, vector<64x128xf32> -> vector<64x128xf32>
    %c0_3 = arith.constant 0 : index
    %c0_4 = arith.constant 0 : index
    %3 = vector.load %arg4[%c0_3, %c0_4] : memref<1x128xf32, #tpu.memory_space<vmem>>, vector<1x128xf32>
    %4 = vector.broadcast %3 : vector<1x128xf32> to vector<64x128xf32>
    %5 = arith.mulf %2, %4 : vector<64x128xf32>
    %c0_5 = arith.constant 0 : index
    %c0_6 = arith.constant 0 : index
    %6 = vector.load %arg5[%c0_5, %c0_6] : memref<1x128xf32, #tpu.memory_space<vmem>>, vector<1x128xf32>
    %7 = vector.broadcast %6 : vector<1x128xf32> to vector<64x128xf32>
    %8 = arith.addf %5, %7 : vector<64x128xf32>
    %cst_7 = arith.constant 0.000000e+00 : f32
    %9 = vector.broadcast %cst_7 : f32 to vector<64x128xf32>
    %10 = arith.maximumf %8, %9 : vector<64x128xf32>
    %11 = arith.truncf %10 : vector<64x128xf32> to vector<64x128xbf16>
    %c0_8 = arith.constant 0 : index
    %c0_9 = arith.constant 0 : index
    %12 = vector.load %arg6[%c0_8, %c0_9] : memref<64x128xbf16, #tpu.memory_space<vmem>>, vector<64x128xbf16>
    tpu.vector_store %arg6[%c0_8, %c0_9], %11 {strides = array<i32>} : memref<64x128xbf16, #tpu.memory_space<vmem>>, vector<64x128xbf16>,
    return
  }
  func.func @transform_0(%arg0: i32, %arg1: i32) -> (i32, i32) {
    %c0_i32 = arith.constant 0 : i32
    return %arg0, %arg1 : i32, i32
  }
  func.func @transform_1(%arg0: i32, %arg1: i32) -> (i32, i32) {
    %c0_i32 = arith.constant 0 : i32
    %c0_i32_0 = arith.constant 0 : i32
    return %arg1, %c0_i32 : i32, i32
  }
  func.func @transform_2(%arg0: i32, %arg1: i32) -> (i32, i32) {
    %c0_i32 = arith.constant 0 : i32
    %c0_i32_0 = arith.constant 0 : i32
    %c0_i32_1 = arith.constant 0 : i32
    return %c0_i32, %c0_i32_0 : i32, i32
  }
  func.func @transform_3(%arg0: i32, %arg1: i32) -> (i32, i32) {
    %c0_i32 = arith.constant 0 : i32
    %c0_i32_0 = arith.constant 0 : i32
    %c0_i32_1 = arith.constant 0 : i32
    return %c0_i32, %c0_i32_0 : i32, i32
  }
  func.func @transform_4(%arg0: i32, %arg1: i32) -> (i32, i32) {
    %c0_i32 = arith.constant 0 : i32
    %c0_i32_0 = arith.constant 0 : i32
    return %arg0, %c0_i32 : i32, i32
  }
}

</mosaic_0001>

<llo_original>
// kernel: tpu_custom_call.1
$region0: #{tpu_custom_call.1}
  #allocation0 [shape = 'u32[]', space=smem, size = 0x4, offset = 0x4, fixed_abs, tag = 'smem constant byte address 0x4 - core index']
  #allocation1 [shape = 'u32[144,128]{1,0:T(1,128)}', space=vmem, size = 0x12000, scoped, tag = 'internal scratch']
  %s0 = inlined_call_operand.vmem [shape: bf16[128,16], index: 0, kind: input, shape index: {}]
  %s1 = inlined_call_operand.vmem [shape: bf16[16,128], index: 1, kind: input, shape index: {}]
  %s2 = inlined_call_operand.vmem [shape: f32[1,128], index: 2, kind: input, shape index: {}]
  %s3 = inlined_call_operand.vmem [shape: f32[1,128], index: 3, kind: input, shape index: {}]
  %s4 = inlined_call_operand.hbm [shape: bf16[128,128], index: 4, kind: output, shape index: {}]
  %s5 = sld [smem:[#allocation0]]
  $region49: #{tpu_custom_call.1} parent=0
    _
  %s7 = ssub.s32 1, %s5
  %s8 = scalar_select 0, %s7, %s5
  $region1: #{tpu_custom_call.1} parent=0
    #allocation2 [shape = 'u8[32768]{0}', space=vmem, size = 0x8000, scoped, tag = 'output window, operand 0']
    #allocation3 [shape = 's32[2]{0}', space=sflag, size = 0x8, scoped, tag = 'scoped memory for tpu_custom_call.1']
    %9 = vsyncpa [#allocation3], 0
    %s10 = scalar_lea.sflag [#allocation3], 1
    %11 = vsyncpa %s10, 0
    loop: start=0, step=1, limit=4
    $region2: #{tpu_custom_call.1} parent=1 // loop_pre_header
      _
    $region3: #{tpu_custom_call.1} parent=1 // loop_header
      %s13 = sphi 0, %s17
      %p14 = scmp.ge.s32.totalorder %s13, 4
      %s20 = sphi 0, %s32
      %s21 = sphi 0, %s28
      %s22 = sphi 0, %s20
      %s23 = sphi 0, %s21
      %s24 = sphi 0, %s22
      %s25 = sphi 0, %s23
      %s37 = sphi 0, %s39
      %s40 = sphi 0, %s37
      %s41 = sphi 0, %s40
      %s57 = sphi 0, %s41
      %s63 = sphi 0, %s65
      %s66 = sphi 0, %s63
      %s67 = sphi 0, %s66
      %s83 = sphi 0, %s67
      %s87 = sphi 0, %s87
      %s89 = sphi 0, %s87
      %s90 = sphi 0, %s89
      %s104 = sphi 0, %s90
      %s108 = sphi 0, %s108
      %s110 = sphi 0, %s108
      %s111 = sphi 0, %s110
      %s125 = sphi 0, %s111
      %s131 = sphi 0, %s133
      %s134 = sphi 0, %s131
      %s135 = sphi 0, %s134
      %s151 = sphi 0, %s135
    $region4: #{tpu_custom_call.1} parent=1 // loop_header_branch
      %16 = sbr.rel (%p14) target = $region8
    $region5: #{tpu_custom_call.1} parent=1 // loop_body
      %s18 = ssub.s32 %s13, 1
      %s19 = ssub.s32 %s13, 2
      %s26 = sadd.s32 1, %s21
      %p27 = scmp.ge.s32.totalorder %s26, 1
      %s28 = scalar_select %p27, 0, %s26
      %s29 = sadd.s32 1, %s20
      %s30 = scalar_select %p27, %s29, %s20
      %p31 = scmp.ge.s32.totalorder %s30, 2
      %s32 = scalar_select %p31, 0, %s30
      %s33 = ssub.s32 %s20, %s32
      %s34 = ssub.s32 %s21, %s28
      %s35 = sor.u32 %s33, %s34
      %p36 = scmp.eq.s32.totalorder %s35, 0
      %s38 = sadd.s32 %s37, 1
      %s39 = scalar_select %p36, %s37, %s38
      %p42 = pneg %p36
      %p43 = scmp.eq.s32.totalorder %s13, 1
      %p44 = por %p42, %p43
      %p45 = scmp.ne.s32.totalorder %s37, %s40
      %p46 = scmp.eq.s32.totalorder %s13, 0
      %p47 = por %p45, %p46
      %p48 = scmp.ne.s32.totalorder %s37, %s40
      %p49 = scmp.eq.s32.totalorder %s18, 1
      %p50 = por %p48, %p49
      %p51 = scmp.ne.s32.totalorder %s40, %s41
      %p52 = scmp.eq.s32.totalorder %s18, 0
      %p53 = por %p51, %p52
      %p54 = scmp.ne.s32.totalorder %s40, %s41
      %p55 = scmp.eq.s32.totalorder %s19, 1
      %p56 = por %p54, %p55
      %p58 = scmp.ne.s32.totalorder %s41, %s57
      %p59 = scmp.eq.s32.totalorder %s19, 0
      %p60 = por %p58, %p59
      %s61 = ssub.s32 %s21, %s28
      %p62 = scmp.eq.s32.totalorder %s61, 0
      %s64 = sadd.s32 %s63, 1
      %s65 = scalar_select %p62, %s63, %s64
      %p68 = pneg %p62
      %p69 = scmp.eq.s32.totalorder %s13, 1
      %p70 = por %p68, %p69
      %p71 = scmp.ne.s32.totalorder %s63, %s66
      %p72 = scmp.eq.s32.totalorder %s13, 0
      %p73 = por %p71, %p72
      %p74 = scmp.ne.s32.totalorder %s63, %s66
      %p75 = scmp.eq.s32.totalorder %s18, 1
      %p76 = por %p74, %p75
      %p77 = scmp.ne.s32.totalorder %s66, %s67
      %p78 = scmp.eq.s32.totalorder %s18, 0
      %p79 = por %p77, %p78
      %p80 = scmp.ne.s32.totalorder %s66, %s67
      %p81 = scmp.eq.s32.totalorder %s19, 1
      %p82 = por %p80, %p81
      %p84 = scmp.ne.s32.totalorder %s67, %s83
      %p85 = scmp.eq.s32.totalorder %s19, 0
      %p86 = por %p84, %p85
      %s88 = sadd.s32 %s87, 1
      %p91 = scmp.eq.s32.totalorder %s13, 1
      %p92 = scmp.ne.s32.totalorder %s87, %s89
      %p93 = scmp.eq.s32.totalorder %s13, 0
      %p94 = por %p92, %p93
      %p95 = scmp.ne.s32.totalorder %s87, %s89
      %p96 = scmp.eq.s32.totalorder %s18, 1
      %p97 = por %p95, %p96
      %p98 = scmp.ne.s32.totalorder %s89, %s90
      %p99 = scmp.eq.s32.totalorder %s18, 0
      %p100 = por %p98, %p99
      %p101 = scmp.ne.s32.totalorder %s89, %s90
      %p102 = scmp.eq.s32.totalorder %s19, 1
      %p103 = por %p101, %p102
      %p105 = scmp.ne.s32.totalorder %s90, %s104
      %p106 = scmp.eq.s32.totalorder %s19, 0
      %p107 = por %p105, %p106
      %s109 = sadd.s32 %s108, 1
      %p112 = scmp.eq.s32.totalorder %s13, 1
      %p113 = scmp.ne.s32.totalorder %s108, %s110
      %p114 = scmp.eq.s32.totalorder %s13, 0
      %p115 = por %p113, %p114
      %p116 = scmp.ne.s32.totalorder %s108, %s110
      %p117 = scmp.eq.s32.totalorder %s18, 1
      %p118 = por %p116, %p117
      %p119 = scmp.ne.s32.totalorder %s110, %s111
      %p120 = scmp.eq.s32.totalorder %s18, 0
      %p121 = por %p119, %p120
      %p122 = scmp.ne.s32.totalorder %s110, %s111
      %p123 = scmp.eq.s32.totalorder %s19, 1
      %p124 = por %p122, %p123
      %p126 = scmp.ne.s32.totalorder %s111, %s125
      %p127 = scmp.eq.s32.totalorder %s19, 0
      %p128 = por %p126, %p127
      %s129 = ssub.s32 %s20, %s32
      %p130 = scmp.eq.s32.totalorder %s129, 0
      %s132 = sadd.s32 %s131, 1
      %s133 = scalar_select %p130, %s131, %s132
      %p136 = pneg %p130
      %p137 = scmp.eq.s32.totalorder %s13, 1
      %p138 = por %p136, %p137
      %p139 = scmp.ne.s32.totalorder %s131, %s134
      %p140 = scmp.eq.s32.totalorder %s13, 0
      %p141 = por %p139, %p140
      %p142 = scmp.ne.s32.totalorder %s131, %s134
      %p143 = scmp.eq.s32.totalorder %s18, 1
      %p144 = por %p142, %p143
      %p145 = scmp.ne.s32.totalorder %s134, %s135
      %p146 = scmp.eq.s32.totalorder %s18, 0
      %p147 = por %p145, %p146
      %p148 = scmp.ne.s32.totalorder %s134, %s135
      %p149 = scmp.eq.s32.totalorder %s19, 1
      %p150 = por %p148, %p149
      %p152 = scmp.ne.s32.totalorder %s135, %s151
      %p153 = scmp.eq.s32.totalorder %s19, 0
      %p154 = por %p152, %p153
      %p155 = scmp.le.s32.totalorder 1, %s13
      %p156 = scmp.lt.s32.totalorder %s13, 3
      %p157 = pnand %p155, %p156
      %p158 = pneg %p157
      // Predicated region
      $region9: #{tpu_custom_call.1} parent=5 // pred_check
        _
      $region10: #{tpu_custom_call.1} parent=5 // pred_check_branch
        %160 = sbr.rel (%p157) target = $region12
      $region11: #{tpu_custom_call.1} parent=5 // pred_region
        %s161 = ssub.s32 %s13, 1
        // Predicated region
        $region13: #{tpu_custom_call.1} parent=11 // pred_check
          %p162 = pneg %p79
        $region14: #{tpu_custom_call.1} parent=11 // pred_check_branch
          %164 = sbr.rel (%p162) target = $region16
        $region15: #{tpu_custom_call.1} parent=11 // pred_region
          %s165 = smul.u32 2, %s23
          %p166 = scmp.lt.s32.totalorder %s165, 1
          %s167 = scalar_select %p166, %s165, 1
          %s168 = smul.addr %s167, 4
          %s169 = scalar_lea.vmem %s1, %s168
          %s170 = smul.u32 2, %s23
        $region16: #{tpu_custom_call.1} parent=11 // pred_fallthru
          _
        // Predicated region
        $region17: #{tpu_custom_call.1} parent=11 // pred_check
          %p171 = pneg %p100
        $region18: #{tpu_custom_call.1} parent=11 // pred_check_branch
          %173 = sbr.rel (%p171) target = $region20
        $region19: #{tpu_custom_call.1} parent=11 // pred_region
          _
        $region20: #{tpu_custom_call.1} parent=11 // pred_fallthru
          _
        // Predicated region
        $region21: #{tpu_custom_call.1} parent=11 // pred_check
          %p174 = pneg %p121
        $region22: #{tpu_custom_call.1} parent=11 // pred_check_branch
          %176 = sbr.rel (%p174) target = $region24
        $region23: #{tpu_custom_call.1} parent=11 // pred_region
          _
        $region24: #{tpu_custom_call.1} parent=11 // pred_fallthru
          _
      $region12: #{tpu_custom_call.1} parent=5 // pred_fallthru
        _
      %p177 = scmp.lt.s32.totalorder %s13, 2
      // Predicated region
      $region25: #{tpu_custom_call.1} parent=5 // pred_check
        %p178 = pneg %p177
      $region26: #{tpu_custom_call.1} parent=5 // pred_check_branch
        %180 = sbr.rel (%p178) target = $region28
      $region27: #{tpu_custom_call.1} parent=5 // pred_region
        // Predicated region
        $region29: #{tpu_custom_call.1} parent=27 // pred_check
          %p181 = pneg %p47
        $region30: #{tpu_custom_call.1} parent=27 // pred_check_branch
          %183 = sbr.rel (%p181) target = $region32
        $region31: #{tpu_custom_call.1} parent=27 // pred_region
          %s184 = smul.u32 8, %s20
          %p185 = scmp.lt.s32.totalorder %s184, 15
          %s186 = scalar_select %p185, %s184, 15
          %p187 = scmp.lt.s32.totalorder %s21, 0
          %s188 = scalar_select %p187, %s21, 0
          %s189 = sadd.s32 %s188, %s186
          %s190 = smul.addr %s189, 4
          %s191 = scalar_lea.vmem %s0, %s190
          %s192 = smul.u32 8, %s20
        $region32: #{tpu_custom_call.1} parent=27 // pred_fallthru
          _
      $region28: #{tpu_custom_call.1} parent=5 // pred_fallthru
        _
      %p193 = scmp.le.s32.totalorder 1, %s13
      %p194 = scmp.lt.s32.totalorder %s13, 3
      %p195 = pnand %p193, %p194
      %p196 = pneg %p195
      // Predicated region
      $region33: #{tpu_custom_call.1} parent=5 // pred_check
        _
      $region34: #{tpu_custom_call.1} parent=5 // pred_check_branch
        %198 = sbr.rel (%p195) target = $region36
      $region35: #{tpu_custom_call.1} parent=5 // pred_region
        %s199 = ssub.s32 %s13, 1
        %s200 = smul.u32 8, %s22
        %p201 = scmp.lt.s32.totalorder %s200, 15
        %s202 = scalar_select %p201, %s200, 15
        %p203 = scmp.lt.s32.totalorder %s23, 0
        %s204 = scalar_select %p203, %s23, 0
        %s205 = sadd.s32 %s204, %s202
        %s206 = smul.addr %s205, 4
        %s207 = scalar_lea.vmem %s0, %s206
        %p208 = pneg %p53
        %p209 = pneg %p50
        %s210 = smul.u32 2, %s23
        %p211 = scmp.lt.s32.totalorder %s210, 1
        %s212 = scalar_select %p211, %s210, 1
        %s213 = smul.addr %s212, 4
        %s214 = scalar_lea.vmem %s1, %s213
        %p215 = pneg %p79
        %p216 = pneg %p76
        %p217 = pneg %p100
        %p218 = pneg %p97
        %p219 = pneg %p121
        %p220 = pneg %p118
        %p221 = pneg %p147
        %p222 = pneg %p144
        %s223 = sand.u32 %s134, 1
        %s224 = scalar_lea.sflag [#allocation3], %s223
        %s225 = sand.u32 %s134, 1
        %s226 = smul.addr %s225, 32
        %s227 = scalar_lea.vmem [#allocation2], %s226
        %s228 = smul.u32 8, %s22
        %p229 = scmp.lt.s32.totalorder %s228, 15
        %s230 = scalar_select %p229, %s228, 15
        %p231 = scmp.lt.s32.totalorder %s23, 0
        %s232 = scalar_select %p231, %s23, 0
        %s233 = sadd.s32 %s232, %s230
        %s234 = smul.addr %s233, 4
        %s235 = scalar_lea.vmem %s0, %s234
        %s236 = smul.u32 8, %s22
        %s237 = smul.u32 2, %s23
        %p238 = scmp.lt.s32.totalorder %s237, 1
        %s239 = scalar_select %p238, %s237, 1
        %s240 = smul.addr %s239, 4
        %s241 = scalar_lea.vmem %s1, %s240
        %s242 = smul.u32 2, %s23
        %s243 = smul.u32 8, %s22
        %v245 = vld [vmem:[%s235] sm:$0xf]
        %v246 = vld [vmem:[%s235 + $0x4] sm:$0xf]
        %v247 = vld [vmem:[%s235 + $0x8] sm:$0xf]
        %v248 = vld [vmem:[%s235 + $0xc] sm:$0xf]
        %v249 = vld [vmem:[%s235 + $0x10] sm:$0xf]
        %v250 = vld [vmem:[%s235 + $0x14] sm:$0xf]
        %v251 = vld [vmem:[%s235 + $0x18] sm:$0xf]
        %v252 = vld [vmem:[%s235 + $0x1c] sm:$0xf]
        %v253 = vld [vmem:[%s241] sm:$0xf]
        %v254 = vld [vmem:[%s241 + $0x4] sm:$0xf]
        %v263 = vunpack.c.l.b16 %v245
        %v264 = vunpack.c.l.b16 %v246
        %v265 = vunpack.c.l.b16 %v247
        %v266 = vunpack.c.l.b16 %v248
        %v267 = vunpack.c.l.b16 %v249
        %v268 = vunpack.c.l.b16 %v250
        %v269 = vunpack.c.l.b16 %v251
        %v270 = vunpack.c.l.b16 %v252
        %v271 = vpack.c.b16 %v264, %v263
        %v272 = vpack.c.b16 %v266, %v265
        %v273 = vpack.c.b16 %v268, %v267
        %v274 = vpack.c.b16 %v270, %v269
        %v277 = vunpack.c.l.b16 %v253
        %v278 = vunpack.c.l.b16 %v254
        %v279 = vpack.c.b16 %v278, %v277
        %vm281 = vcmask 130048
        %v283 = vsel %vm281, %v271, 0
        %v286 = vsel %vm281, %v272, 0
        %v289 = vsel %vm281, %v273, 0
        %v292 = vsel %vm281, %v274, 0
        %294 = vmatprep.subr.bf16.mxu0 0
        %295 = vmatpush1.bf16.msra.mxu0 %v279
        %296 = vmatprep.subr.bf16.mxu0 0
        %297 = vmatpush1.bf16.msra.mxu0 0
        %298 = vmatprep.subr.bf16.mxu0 0
        %299 = vmatpush1.bf16.msra.mxu0 0
        %300 = vmatprep.subr.bf16.mxu0 0
        %301 = vmatpush1.bf16.msra.mxu0 0
        %302 = vmatprep.subr.bf16.mxu0 0
        %303 = vmatpush1.bf16.msra.mxu0 0
        %304 = vmatprep.subr.bf16.mxu0 0
        %305 = vmatpush1.bf16.msra.mxu0 0
        %306 = vmatprep.subr.bf16.mxu0 0
        %307 = vmatpush1.bf16.msra.mxu0 0
        %308 = vmatprep.subr.bf16.mxu0 0
        %309 = vmatpush1.bf16.msra.mxu0 0
        %310 = vmatprep.subr.bf16.mxu0 0
        %311 = vmatpush1.bf16.msra.mxu0 0
        %312 = vmatprep.subr.bf16.mxu0 0
        %313 = vmatpush1.bf16.msra.mxu0 0
        %314 = vmatprep.subr.bf16.mxu0 0
        %315 = vmatpush1.bf16.msra.mxu0 0
        %316 = vmatprep.subr.bf16.mxu0 0
        %317 = vmatpush1.bf16.msra.mxu0 0
        %318 = vmatprep.subr.bf16.mxu0 0
        %319 = vmatpush1.bf16.msra.mxu0 0
        %320 = vmatprep.subr.bf16.mxu0 0
        %321 = vmatpush1.bf16.msra.mxu0 0
        %322 = vmatprep.subr.bf16.mxu0 0
        %323 = vmatpush1.bf16.msra.mxu0 0
        %324 = vmatprep.subr.bf16.mxu0 0
        %325 = vmatpush1.bf16.msra.mxu0 0
        %326 = vmatprep.mubr.bf16.mxu0 0
        %327 = vmatmul.mubr.bf16.gmra.mrb[0].mxu0 %v283
        %v328 = vpop.f32.mrb[0].mxu0
        %v329 = vadd.f32 0.0, %v328
        %v330 = vpop.f32.mrb[0].mxu0
        %v331 = vpop.f32.mrb[0].mxu0
        %v332 = vadd.f32 0.0, %v331
        %v333 = vpop.f32.mrb[0].mxu0
        %334 = vmatprep.mubr.bf16.mxu0 0
        %335 = vmatmul.mubr.bf16.gmra.mrb[0].mxu0 %v286
        %v336 = vpop.f32.mrb[0].mxu0
        %v337 = vadd.f32 0.0, %v336
        %v338 = vpop.f32.mrb[0].mxu0
        %v339 = vpop.f32.mrb[0].mxu0
        %v340 = vadd.f32 0.0, %v339
        %v341 = vpop.f32.mrb[0].mxu0
        %342 = vmatprep.mubr.bf16.mxu0 0
        %343 = vmatmul.mubr.bf16.gmra.mrb[0].mxu0 %v289
        %v344 = vpop.f32.mrb[0].mxu0
        %v345 = vadd.f32 0.0, %v344
        %v346 = vpop.f32.mrb[0].mxu0
        %v347 = vpop.f32.mrb[0].mxu0
        %v348 = vadd.f32 0.0, %v347
        %v349 = vpop.f32.mrb[0].mxu0
        %350 = vmatprep.mubr.bf16.mxu0 0
        %351 = vmatmul.mubr.bf16.gmra.mrb[0].mxu0 %v292
        %v352 = vpop.f32.mrb[0].mxu0
        %v353 = vadd.f32 0.0, %v352
        %v354 = vpop.f32.mrb[0].mxu0
        %v355 = vpop.f32.mrb[0].mxu0
        %v356 = vadd.f32 0.0, %v355
        %v357 = vpop.f32.mrb[0].mxu0
        %358 = vdwg.mxu0
        %v359 = vld [vmem:[%s2] sm:$0x1]
        %v361 = vlaneseq
        %v362 = vshrl.u32 %v361, 7
        %v363 = vsub.s32 0, %v362
        %v364 = vrot.slane %v359, %v363
        %v366 = vmul.f32 %v329, %v364
        %v367 = vmul.f32 %v332, %v364
        %v368 = vmul.f32 %v337, %v364
        %v369 = vmul.f32 %v340, %v364
        %v370 = vmul.f32 %v345, %v364
        %v371 = vmul.f32 %v348, %v364
        %v372 = vmul.f32 %v353, %v364
        %v373 = vmul.f32 %v356, %v364
        %v374 = vld [vmem:[%s3] sm:$0x1]
        %v376 = vlaneseq
        %v377 = vshrl.u32 %v376, 7
        %v378 = vsub.s32 0, %v377
        %v379 = vrot.slane %v374, %v378
        %v381 = vadd.f32 %v366, %v379
        %v382 = vadd.f32 %v367, %v379
        %v383 = vadd.f32 %v368, %v379
        %v384 = vadd.f32 %v369, %v379
        %v385 = vadd.f32 %v370, %v379
        %v386 = vadd.f32 %v371, %v379
        %v387 = vadd.f32 %v372, %v379
        %v388 = vadd.f32 %v373, %v379
        %v389 = vmax.f32 %v381, 0.0
        %v390 = vmax.f32 %v382, 0.0
        %v391 = vmax.f32 %v383, 0.0
        %v392 = vmax.f32 %v384, 0.0
        %v393 = vmax.f32 %v385, 0.0
        %v394 = vmax.f32 %v386, 0.0
        %v395 = vmax.f32 %v387, 0.0
        %v396 = vmax.f32 %v388, 0.0
        %v397 = vpack.c.bf16 %v390, %v389
        %v398 = vpack.c.bf16 %v392, %v391
        %v399 = vpack.c.bf16 %v394, %v393
        %v400 = vpack.c.bf16 %v396, %v395
        %v405 = vunpack.c.l.b16 %v397
        %v406 = vunpack.c.h.b16 %v397
        %v407 = vunpack.c.l.b16 %v398
        %v408 = vunpack.c.h.b16 %v398
        %v409 = vunpack.c.l.b16 %v399
        %v410 = vunpack.c.h.b16 %v399
        %v411 = vunpack.c.l.b16 %v400
        %v412 = vunpack.c.h.b16 %v400
        %v413 = vpack.c.b16 %v405, %v405
        %v414 = vpack.c.b16 %v406, %v406
        %v415 = vpack.c.b16 %v407, %v407
        %v416 = vpack.c.b16 %v408, %v408
        %v417 = vpack.c.b16 %v409, %v409
        %v418 = vpack.c.b16 %v410, %v410
        %v419 = vpack.c.b16 %v411, %v411
        %v420 = vpack.c.b16 %v412, %v412
        %429 = vst [vmem:[%s227] sm:$0xf] %v413
        %430 = vst [vmem:[%s227 + $0x4] sm:$0xf] %v414
        %431 = vst [vmem:[%s227 + $0x8] sm:$0xf] %v415
        %432 = vst [vmem:[%s227 + $0xc] sm:$0xf] %v416
        %433 = vst [vmem:[%s227 + $0x10] sm:$0xf] %v417
        %434 = vst [vmem:[%s227 + $0x14] sm:$0xf] %v418
        %435 = vst [vmem:[%s227 + $0x18] sm:$0xf] %v419
        %436 = vst [vmem:[%s227 + $0x1c] sm:$0xf] %v420
        %s437 = sand.u32 %s134, 1
        %s438 = scalar_lea.sflag [#allocation3], %s437
        %s439 = sand.u32 %s134, 1
        %s440 = smul.addr %s439, 32
        %s441 = scalar_lea.vmem [#allocation2], %s440
        // Predicated region
        $region37: #{tpu_custom_call.1} parent=35 // pred_check
          %p442 = pneg %p144
        $region38: #{tpu_custom_call.1} parent=35 // pred_check_branch
          %444 = sbr.rel (%p442) target = $region40
        $region39: #{tpu_custom_call.1} parent=35 // pred_region
          %s445 = smul.u32 8, %s22
          %s447 = ssub.s32 512, 512
          %448 = vsyncadd %s438, %s447
          %s449 = smul.addr %s445, 64
          %s450 = scalar_lea.hbm %s4, %s449
          %s451 = sshll.u32 %s441, 4
          %s452 = int_to_ptr.vmem [resolvable:$true] %s451
          %457 = dma.vmem_to_hbm [thread:$0]  %s452, 512, %s450, %s438, 64, 64, 4
        $region40: #{tpu_custom_call.1} parent=35 // pred_fallthru
          _
      $region36: #{tpu_custom_call.1} parent=5 // pred_fallthru
        _
      %p458 = scmp.le.s32.totalorder 2, %s13
      // Predicated region
      $region41: #{tpu_custom_call.1} parent=5 // pred_check
        %p459 = pneg %p458
      $region42: #{tpu_custom_call.1} parent=5 // pred_check_branch
        %461 = sbr.rel (%p459) target = $region44
      $region43: #{tpu_custom_call.1} parent=5 // pred_region
        %s462 = ssub.s32 %s13, 2
        // Predicated region
        $region45: #{tpu_custom_call.1} parent=43 // pred_check
          %p463 = pneg %p150
        $region46: #{tpu_custom_call.1} parent=43 // pred_check_branch
          %465 = sbr.rel (%p463) target = $region48
        $region47: #{tpu_custom_call.1} parent=43 // pred_region
          %s466 = sand.u32 %s135, 1
          %s467 = scalar_lea.sflag [#allocation3], %s466
          %s468 = sand.u32 %s135, 1
          %s469 = smul.addr %s468, 32
          %s470 = scalar_lea.vmem [#allocation2], %s469
          %471 = dma.done %s467, 512
        $region48: #{tpu_custom_call.1} parent=43 // pred_fallthru
          _
      $region44: #{tpu_custom_call.1} parent=5 // pred_fallthru
        _
    $region6: #{tpu_custom_call.1} parent=1 // loop_footer
      %s17 = sadd.s32 1, %s13
    $region7: #{tpu_custom_call.1} parent=1 // loop_footer_branch
      %12 = sbr.rel target = $region3
    $region8: #{tpu_custom_call.1} parent=1 // loop_exit
      _
    %472 = vsyncpa [#allocation3], 1
    %s473 = scalar_lea.sflag [#allocation3], 1
    %474 = vsyncpa %s473, 1

</llo_original>
